<compile_context>
chip_gen: v5e
topology: v5e:2x2
jax: 0.10.0
libtpu: 0.0.40
codegen_flags: <defaults>
</compile_context>

<pallas_src>
import jax
import jax.numpy as jnp
import numpy as np
from jax import lax
from jax.experimental import pallas as pl
from jax.experimental.pallas import tpu as pltpu


def _make_attention_mil_kernel(n_valid):
    """Builds the per-block kernel; `n_valid` (static) masks padded instances."""

    def kernel(x_ref, w1_ref, b1_ref, w2_ref, b2_ref, out_ref):
        bt, n, d = x_ref.shape
        x = x_ref[...]                                  # (Bt, N, D), input dtype
        x_rows = x.reshape(bt * n, d)                   # fold bags into sublanes

        # Linear -> Tanh -> Linear as two fused row-block matmuls on the MXU.
        h = jnp.tanh(
            jnp.dot(x_rows, w1_ref[...], preferred_element_type=jnp.float32)
            + b1_ref[...])                              # (Bt*N, A) f32
        logits = (jnp.dot(h, w2_ref[...], preferred_element_type=jnp.float32)
                  + b2_ref[...])                        # (Bt*N, Kp) f32
        k = logits.shape[-1]
        logits = logits.reshape(bt, n, k)               # (Bt, N, Kp)

        # Mask out zero-padded instances (static branch; usually skipped).
        if n_valid < n:
            inst = lax.broadcasted_iota(jnp.int32, (bt, n, k), 1)
            logits = jnp.where(inst < n_valid, logits, -jnp.inf)

        # Exact softmax over the instance axis (N) -- no transpose needed.
        logits = logits - jnp.max(logits, axis=1, keepdims=True)
        e = jnp.exp(logits)
        attn = e / jnp.sum(e, axis=1, keepdims=True)    # exact division (f32)

        # Pool instances: contract attn axis 1 (N) against x axis 1 (N).
        #   (Bt, N, Kp) x (Bt, N, D) -> (Bt, Kp, D); MXU absorbs the transpose.
        m = lax.dot_general(
            attn.astype(x.dtype), x,
            dimension_numbers=(((1,), (1,)), ((0,), (0,))),
            preferred_element_type=jnp.float32)
        out_ref[...] = m.astype(out_ref.dtype)

    return kernel


def attention_layer(x, w1, b1, w2, b2, *, block_b=None):
    """Attention MIL pooling. x: (B, N, D) -> (B, K, D)."""
    B, N, D = x.shape
    A = w1.shape[1]
    K = w2.shape[1]
    dtype = x.dtype
    itemsize = jnp.dtype(dtype).itemsize

    # --- pad K up to a multiple of 8: sublane-dense output stores. -----------
    K_pad = max(8, -(-K // 8) * 8)
    if K_pad != K:
        w2p = jnp.pad(w2, ((0, 0), (0, K_pad - K)))
        b2p = jnp.pad(b2, (0, K_pad - K))
    else:
        w2p, b2p = w2, b2

    # --- pad N up to the sublane pack so in-kernel reshapes preserve layout. -
    sub = 8 if itemsize >= 4 else 16
    N_pad = -(-N // sub) * sub
    x_p = jnp.pad(x, ((0, 0), (0, N_pad - N), (0, 0))) if N_pad != N else x

    # --- block_b: target ~2048 rows per grid step, capped by a VMEM budget. --
    VMEM_TILE_BUDGET = 20 * 1024 * 1024   # conservative; leaves headroom on v7x

    def tile_bytes(bb):
        x_t = 2 * bb * N_pad * D * itemsize            # x tile, double buffered
        o_t = 2 * bb * K_pad * D * itemsize            # out tile, double buffered
        f32_i = bb * N_pad * (A + K_pad) * 4           # h + logits (f32)
        f32_acc = bb * K_pad * D * 4                   # f32 pooling accumulator
        w_t = (D * A + A + A * K_pad + K_pad) * itemsize
        return x_t + o_t + f32_i + f32_acc + w_t

    if block_b is None:
        target_rows = 2048
        block_b = max(1, target_rows // max(N_pad, 1))
        block_b = min(block_b, B)
        while block_b > 1 and tile_bytes(block_b) > VMEM_TILE_BUDGET:
            block_b = (block_b + 1) // 2
    block_b = max(1, min(block_b, B))

    # --- pad B up to a multiple of block_b (no divisor search / no cliffs). --
    grid_b = -(-B // block_b)
    B_pad = grid_b * block_b
    if B_pad != B:
        x_p = jnp.pad(x_p, ((0, B_pad - B), (0, 0), (0, 0)))

    b1_2d = b1.reshape(1, A)
    b2_2d = b2p.reshape(1, K_pad)

    def full(shape):
        zeros = (0,) * len(shape)
        return pl.BlockSpec(shape, lambda b: zeros)

    out = pl.pallas_call(
        _make_attention_mil_kernel(N),
        out_shape=jax.ShapeDtypeStruct((B_pad, K_pad, D), dtype),
        grid_spec=pltpu.PrefetchScalarGridSpec(
            num_scalar_prefetch=0,
            grid=(grid_b,),
            in_specs=[
                pl.BlockSpec((block_b, N_pad, D), lambda b: (b, 0, 0)),  # x
                full((D, A)),                                            # W1
                full((1, A)),                                            # b1
                full((A, K_pad)),                                        # W2
                full((1, K_pad)),                                        # b2
            ],
            out_specs=pl.BlockSpec((block_b, K_pad, D), lambda b: (b, 0, 0)),
        ),
        compiler_params=pltpu.CompilerParams(
            dimension_semantics=("parallel",),
            vmem_limit_bytes=48 * 1024 * 1024),
    )(x_p, w1, b1_2d, w2p, b2_2d)

    return out[:B, :K, :]


def attention_reference(x, w1, b1, w2, b2):
    """Plain-JAX reference mirroring the PyTorch forward pass (f32-exact matmuls)."""
    hp = lax.Precision.HIGHEST
    a = jnp.tanh(jnp.einsum("bnd,da->bna", x, w1, precision=hp) + b1)
    a = jnp.einsum("bna,ak->bnk", a, w2, precision=hp) + b2       # (B, N, K)
    a = jax.nn.softmax(jnp.swapaxes(a, 2, 1), axis=2)             # (B, K, N)
    return jnp.einsum("bkn,bnd->bkd", a, x, precision=hp)         # (B, K, D)


if __name__ == "__main__":
    # Small shapes consistent with the module's forward:
    B, N = 2, 8               # batch of bags, instances per bag
    dim_in = 32
    dim_attention = 16
    num_attention_weights = 4

    key = jax.random.PRNGKey(0)
    kx, kw1, kb1, kw2, kb2 = jax.random.split(key, 5)

    # Deterministic nn.Linear-like init (uniform with 1/sqrt(fan_in) bounds).
    def lin_init(kw, kb, fan_in, fan_out):
        bound = np.sqrt(1.0 / fan_in)
        w = jax.random.uniform(kw, (fan_in, fan_out), jnp.float32, -bound, bound)
        b = jax.random.uniform(kb, (fan_out,), jnp.float32, -bound, bound)
        return w, b

    x = jax.random.normal(kx, (B, N, dim_in), jnp.float32)
    w1, b1 = lin_init(kw1, kb1, dim_in, dim_attention)
    w2, b2 = lin_init(kw2, kb2, dim_attention, num_attention_weights)

    out = attention_layer(x, w1, b1, w2, b2)
    out = jax.block_until_ready(out)

    ref = attention_reference(x, w1, b1, w2, b2)
    np.testing.assert_allclose(np.asarray(out), np.asarray(ref),
                               rtol=2e-4, atol=2e-4)
    print("KERNEL_OK")
</pallas_src>

<mosaic_0001>
module attributes {stable_mosaic.version = 11 : i64} {
  func.func @kernel(%arg0: i32, %arg1: memref<2x8x32xf32, #tpu.memory_space<vmem>>, %arg2: memref<32x16xf32, #tpu.memory_space<vmem>>, %arg3: memref<1x16xf32, #tpu.memory_space<vmem>>, %arg4: memref<16x8xf32, #tpu.memory_space<vmem>>, %arg5: memref<1x8xf32, #tpu.memory_space<vmem>>, %arg6: memref<2x8x32xf32, #tpu.memory_space<vmem>>) attributes {dimension_semantics = [#tpu.dimension_semantics<parallel>], iteration_bounds = array<i64: 1>, scalar_prefetch = 0 : i64, scratch_operands = 0 : i64, tpu.core_type = #tpu.core_type<tc>, window_params = [{transform_indices = @transform_0, window_bounds = array<i64: 2, 8, 32>}, {pipeline_mode = #tpu.pipeline_mode<synchronous>, transform_indices = @transform_1, window_bounds = array<i64: 32, 16>}, {pipeline_mode = #tpu.pipeline_mode<synchronous>, transform_indices = @transform_2, window_bounds = array<i64: 1, 16>}, {pipeline_mode = #tpu.pipeline_mode<synchronous>, transform_indices = @transform_3, window_bounds = array<i64: 16, 8>}, {pipeline_mode = #tpu.pipeline_mode<synchronous>, transform_indices = @transform_4, window_bounds = array<i64: 1, 8>}, {transform_indices = @transform_5, window_bounds = array<i64: 2, 8, 32>}]} {
    %c0 = arith.constant 0 : index
    %c0_0 = arith.constant 0 : index
    %c0_1 = arith.constant 0 : index
    %0 = vector.load %arg1[%c0, %c0_0, %c0_1] : memref<2x8x32xf32, #tpu.memory_space<vmem>>, vector<2x8x32xf32>
    %1 = vector.shape_cast %0 : vector<2x8x32xf32> to vector<16x32xf32>
    %c0_2 = arith.constant 0 : index
    %c0_3 = arith.constant 0 : index
    %2 = vector.load %arg2[%c0_2, %c0_3] : memref<32x16xf32, #tpu.memory_space<vmem>>, vector<32x16xf32>
    %cst = arith.constant dense<0.000000e+00> : vector<16x16xf32>
    %3 = tpu.matmul %1, %2, %cst {dimension_numbers = #tpu.dot_dimension_numbers<[1], [0], [0], [1], [0, 0, 1, 1], [], []>} : vector<16x32xf32>, vector<32x16xf32>, vector<16x16xf32> -> vector<16x16xf32>
    %c0_4 = arith.constant 0 : index
    %c0_5 = arith.constant 0 : index
    %4 = vector.load %arg3[%c0_4, %c0_5] : memref<1x16xf32, #tpu.memory_space<vmem>>, vector<1x16xf32>
    %5 = vector.broadcast %4 : vector<1x16xf32> to vector<16x16xf32>
    %6 = arith.addf %3, %5 : vector<16x16xf32>
    %7 = math.tanh %6 : vector<16x16xf32>
    %c0_6 = arith.constant 0 : index
    %c0_7 = arith.constant 0 : index
    %8 = vector.load %arg4[%c0_6, %c0_7] : memref<16x8xf32, #tpu.memory_space<vmem>>, vector<16x8xf32>
    %cst_8 = arith.constant dense<0.000000e+00> : vector<16x8xf32>
    %9 = tpu.matmul %7, %8, %cst_8 {dimension_numbers = #tpu.dot_dimension_numbers<[1], [0], [0], [1], [0, 0, 1, 1], [], []>} : vector<16x16xf32>, vector<16x8xf32>, vector<16x8xf32> -> vector<16x8xf32>
    %c0_9 = arith.constant 0 : index
    %c0_10 = arith.constant 0 : index
    %10 = vector.load %arg5[%c0_9, %c0_10] : memref<1x8xf32, #tpu.memory_space<vmem>>, vector<1x8xf32>
    %11 = vector.broadcast %10 : vector<1x8xf32> to vector<16x8xf32>
    %12 = arith.addf %9, %11 : vector<16x8xf32>
    %13 = vector.shape_cast %12 : vector<16x8xf32> to vector<2x8x8xf32>
    %cst_11 = arith.constant dense<0xFF800000> : vector<2x8xf32>
    %14 = vector.multi_reduction <maximumf>, %13, %cst_11 [1] : vector<2x8x8xf32> to vector<2x8xf32>
    %15 = vector.shape_cast %14 : vector<2x8xf32> to vector<2x1x8xf32>
    %16 = vector.broadcast %15 : vector<2x1x8xf32> to vector<2x8x8xf32>
    %17 = arith.subf %13, %16 : vector<2x8x8xf32>
    %18 = math.exp %17 : vector<2x8x8xf32>
    %cst_12 = arith.constant dense<0.000000e+00> : vector<2x8xf32>
    %19 = vector.multi_reduction <add>, %18, %cst_12 [1] : vector<2x8x8xf32> to vector<2x8xf32>
    %20 = vector.shape_cast %19 : vector<2x8xf32> to vector<2x1x8xf32>
    %21 = vector.broadcast %20 : vector<2x1x8xf32> to vector<2x8x8xf32>
    %22 = arith.divf %18, %21 : vector<2x8x8xf32>
    %cst_13 = arith.constant dense<0.000000e+00> : vector<2x8x32xf32>
    %23 = tpu.matmul %22, %0, %cst_13 {dimension_numbers = #tpu.dot_dimension_numbers<[1], [1], [2], [2], [0, 0, 0, 2, 1, 2], [0], [0]>} : vector<2x8x8xf32>, vector<2x8x32xf32>, vector<2x8x32xf32> -> vector<2x8x32xf32>
    %c0_14 = arith.constant 0 : index
    %c0_15 = arith.constant 0 : index
    %c0_16 = arith.constant 0 : index
    %24 = vector.load %arg6[%c0_14, %c0_15, %c0_16] : memref<2x8x32xf32, #tpu.memory_space<vmem>>, vector<2x8x32xf32>
    tpu.vector_store %arg6[%c0_14, %c0_15, %c0_16], %23 {strides = array<i32>} : memref<2x8x32xf32, #tpu.memory_space<vmem>>, vector<2x8x32xf32>,
    return
  }
  func.func @transform_0(%arg0: i32) -> (i32, i32, i32) {
    %c0_i32 = arith.constant 0 : i32
    %c0_i32_0 = arith.constant 0 : i32
    %c0_i32_1 = arith.constant 0 : i32
    return %arg0, %c0_i32, %c0_i32_0 : i32, i32, i32
  }
  func.func @transform_1(%arg0: i32) -> (i32, i32) {
    %c0_i32 = arith.constant 0 : i32
    %c0_i32_0 = arith.constant 0 : i32
    %c0_i32_1 = arith.constant 0 : i32
    return %c0_i32, %c0_i32_0 : i32, i32
  }
  func.func @transform_2(%arg0: i32) -> (i32, i32) {
    %c0_i32 = arith.constant 0 : i32
    %c0_i32_0 = arith.constant 0 : i32
    %c0_i32_1 = arith.constant 0 : i32
    return %c0_i32, %c0_i32_0 : i32, i32
  }
  func.func @transform_3(%arg0: i32) -> (i32, i32) {
    %c0_i32 = arith.constant 0 : i32
    %c0_i32_0 = arith.constant 0 : i32
    %c0_i32_1 = arith.constant 0 : i32
    return %c0_i32, %c0_i32_0 : i32, i32
  }
  func.func @transform_4(%arg0: i32) -> (i32, i32) {
    %c0_i32 = arith.constant 0 : i32
    %c0_i32_0 = arith.constant 0 : i32
    %c0_i32_1 = arith.constant 0 : i32
    return %c0_i32, %c0_i32_0 : i32, i32
  }
  func.func @transform_5(%arg0: i32) -> (i32, i32, i32) {
    %c0_i32 = arith.constant 0 : i32
    %c0_i32_0 = arith.constant 0 : i32
    %c0_i32_1 = arith.constant 0 : i32
    return %arg0, %c0_i32, %c0_i32_0 : i32, i32, i32
  }
}

</mosaic_0001>

<llo_original>
// kernel: tpu_custom_call.1
$region0: #{tpu_custom_call.1}
  #allocation0 [shape = 'u32[]', space=smem, size = 0x4, offset = 0x4, fixed_abs, tag = 'smem constant byte address 0x4 - core index']
  #allocation1 [shape = 'u32[72,128]{1,0:T(1,128)}', space=vmem, size = 0x9000, scoped, tag = 'internal scratch']
  %s0 = inlined_call_operand.vmem [shape: f32[2,8,32], index: 0, kind: input, shape index: {}]
  %s1 = inlined_call_operand.vmem [shape: f32[32,16], index: 1, kind: input, shape index: {}]
  %s2 = inlined_call_operand.vmem [shape: f32[1,16], index: 2, kind: input, shape index: {}]
  %s3 = inlined_call_operand.vmem [shape: f32[16,8], index: 3, kind: input, shape index: {}]
  %s4 = inlined_call_operand.vmem [shape: f32[1,8], index: 4, kind: input, shape index: {}]
  %s5 = inlined_call_operand.hbm [shape: f32[2,8,32], index: 5, kind: output, shape index: {}]
  %s6 = sld [smem:[#allocation0]]
  $region30: #{tpu_custom_call.1} parent=0
    _
  %s8 = ssub.s32 1, %s6
  %s9 = scalar_select 0, %s8, %s6
  $region1: #{tpu_custom_call.1} parent=0
    #allocation2 [shape = 'u8[8192]{0}', space=vmem, size = 0x2000, scoped, tag = 'output window, operand 0, single buffered']
    #allocation3 [shape = 's32[1]{0}', space=sflag, size = 0x4, scoped, tag = 'scoped memory for tpu_custom_call.1']
    %10 = vsyncpa [#allocation3], 0
    // Predicated region
    $region2: #{tpu_custom_call.1} parent=1 // pred_check
      _
    $region3: #{tpu_custom_call.1} parent=1 // pred_check_branch
      %12 = sbr.rel (0) target = $region5
    $region4: #{tpu_custom_call.1} parent=1 // pred_region
      _
    $region5: #{tpu_custom_call.1} parent=1 // pred_fallthru
      _
    // Predicated region
    $region6: #{tpu_custom_call.1} parent=1 // pred_check
      _
    $region7: #{tpu_custom_call.1} parent=1 // pred_check_branch
      %14 = sbr.rel (0) target = $region9
    $region8: #{tpu_custom_call.1} parent=1 // pred_region
      _
    $region9: #{tpu_custom_call.1} parent=1 // pred_fallthru
      _
    // Predicated region
    $region10: #{tpu_custom_call.1} parent=1 // pred_check
      _
    $region11: #{tpu_custom_call.1} parent=1 // pred_check_branch
      %16 = sbr.rel (0) target = $region13
    $region12: #{tpu_custom_call.1} parent=1 // pred_region
      _
    $region13: #{tpu_custom_call.1} parent=1 // pred_fallthru
      _
    // Predicated region
    $region14: #{tpu_custom_call.1} parent=1 // pred_check
      _
    $region15: #{tpu_custom_call.1} parent=1 // pred_check_branch
      %18 = sbr.rel (0) target = $region17
    $region16: #{tpu_custom_call.1} parent=1 // pred_region
      _
    $region17: #{tpu_custom_call.1} parent=1 // pred_fallthru
      _
    // Predicated region
    $region18: #{tpu_custom_call.1} parent=1 // pred_check
      _
    $region19: #{tpu_custom_call.1} parent=1 // pred_check_branch
      %20 = sbr.rel (0) target = $region21
    $region20: #{tpu_custom_call.1} parent=1 // pred_region
      _
    $region21: #{tpu_custom_call.1} parent=1 // pred_fallthru
      _
    %v21 = vld [vmem:[%s0] sm:$0xff]
    %v22 = vld [vmem:[%s0 + $0x8] sm:$0xff]
    %v23 = vld [vmem:[%s1] sm:$0xff]
    %v24 = vld [vmem:[%s1 + $0x8] sm:$0xff]
    %v25 = vld [vmem:[%s1 + $0x10] sm:$0xff]
    %v26 = vld [vmem:[%s1 + $0x18] sm:$0xff]
    %v27 = vld [vmem:[%s2] sm:$0x1]
    %v29 = vperm.slane %v27, 0
    %vm31 = vcmask 261120
    %v33 = vsel %vm31, %v21, 0
    %v36 = vsel %vm31, %v22, 0
    %38 = vmatpush.msra.mxu0 0.0
    %39 = vmatpush.msra.mxu0 0.0
    %40 = vmatpush.msra.mxu0 0.0
    %41 = vmatpush.msra.mxu0 0.0
    %42 = vmatpush.msra.mxu0 0.0
    %43 = vmatpush.msra.mxu0 0.0
    %44 = vmatpush.msra.mxu0 0.0
    %45 = vmatpush.msra.mxu0 0.0
    %46 = vmatpush.msra.mxu0 0.0
    %47 = vmatpush.msra.mxu0 0.0
    %48 = vmatpush.msra.mxu0 0.0
    %49 = vmatpush.msra.mxu0 0.0
    %50 = vmatpush.msra.mxu0 %v26
    %51 = vmatpush.msra.mxu0 %v25
    %52 = vmatpush.msra.mxu0 %v24
    %53 = vmatpush.msra.mxu0 %v23
    %54 = vmatmul.f32.gmra.mxu0 %v33
    %v55 = vpop.f32.mrf.mxu0
    %v56 = vadd.f32 %v29, %v55
    %57 = vmatmul.f32.gmra.mxu0 %v36
    %v58 = vpop.f32.mrf.mxu0
    %v59 = vadd.f32 %v29, %v58
    %60 = vdwg.mxu0
    %v61 = vtanh.pop %v56
    %v62 = vtanh.pop %v59
    %v63 = vld [vmem:[%s3] sm:$0xff]
    %v64 = vld [vmem:[%s3 + $0x8] sm:$0xff]
    %v65 = vld [vmem:[%s4] sm:$0x1]
    %v67 = vperm.slane %v65, 0
    %vm69 = vcmask 130048
    %v71 = vsel %vm69, %v61, 0
    %v74 = vsel %vm69, %v62, 0
    %76 = vmatpush.msra.mxu0 0.0
    %77 = vmatpush.msra.mxu0 0.0
    %78 = vmatpush.msra.mxu0 0.0
    %79 = vmatpush.msra.mxu0 0.0
    %80 = vmatpush.msra.mxu0 0.0
    %81 = vmatpush.msra.mxu0 0.0
    %82 = vmatpush.msra.mxu0 0.0
    %83 = vmatpush.msra.mxu0 0.0
    %84 = vmatpush.msra.mxu0 0.0
    %85 = vmatpush.msra.mxu0 0.0
    %86 = vmatpush.msra.mxu0 0.0
    %87 = vmatpush.msra.mxu0 0.0
    %88 = vmatpush.msra.mxu0 0.0
    %89 = vmatpush.msra.mxu0 0.0
    %90 = vmatpush.msra.mxu0 %v64
    %91 = vmatpush.msra.mxu0 %v63
    %92 = vmatmul.f32.gmra.mxu0 %v71
    %v93 = vpop.f32.mrf.mxu0
    %v94 = vadd.f32 %v67, %v93
    %95 = vmatmul.f32.gmra.mxu0 %v74
    %v96 = vpop.f32.mrf.mxu0
    %v97 = vadd.f32 %v67, %v96
    %98 = vdwg.mxu0
    %vm99 = vcmask 64512
    %v100 = vsel %vm99, %v94, -inf
    %v101 = vrot.slane %v100, 4
    %v102 = vmax.f32 %v100, %v101
    %v103 = vrot.slane %v102, 2
    %v104 = vmax.f32 %v102, %v103
    %v105 = vrot.slane %v104, 1
    %v106 = vmax.f32 %v104, %v105
    %v107 = vsel %vm99, %v97, -inf
    %v108 = vrot.slane %v107, 4
    %v109 = vmax.f32 %v107, %v108
    %v110 = vrot.slane %v109, 2
    %v111 = vmax.f32 %v109, %v110
    %v112 = vrot.slane %v111, 1
    %v113 = vmax.f32 %v111, %v112
    %v114 = vsub.f32 %v94, %v106
    %v115 = vsub.f32 %v97, %v113
    %v116 = vmul.f32 %v114, 1.442695
    %v117 = vpow.pop %v116
    %v118 = vmul.f32 %v115, 1.442695
    %v119 = vpow.pop %v118
    %v120 = vsel %vm99, %v117, 0.0
    %v121 = vrot.slane %v120, 4
    %v122 = vadd.f32 %v120, %v121
    %v123 = vrot.slane %v122, 2
    %v124 = vadd.f32 %v122, %v123
    %v125 = vrot.slane %v124, 1
    %v126 = vadd.f32 %v124, %v125
    %v127 = vsel %vm99, %v119, 0.0
    %v128 = vrot.slane %v127, 4
    %v129 = vadd.f32 %v127, %v128
    %v130 = vrot.slane %v129, 2
    %v131 = vadd.f32 %v129, %v130
    %v132 = vrot.slane %v131, 1
    %v133 = vadd.f32 %v131, %v132
    %v134 = vrcp.pop %v126
    %v135 = vmul.f32 %v126, %v134
    %v136 = vsub.f32 1.0, %v135
    %v137 = vmul.f32 %v134, %v136
    %v138 = vadd.f32 %v134, %v137
    %vm139 = vweird.f32 %v126
    %vm140 = vweird.f32 %v134
    %vm141 = vmor %vm139, %vm140
    %v142 = vsel %vm141, %v134, %v138
    %v143 = vand.u32 2147483647, %v126
    %vm144 = vcmp.eq.f32.partialorder %v143, 8.507059e+37
    %v145 = vand.u32 %v126, 2147483648
    %v146 = vor.u32 1.1754944e-38, %v145
    %v147 = vsel %vm144, %v146, %v142
    %v148 = vmul.f32 %v117, %v147
    %v149 = vrcp.pop %v133
    %v150 = vmul.f32 %v133, %v149
    %v151 = vsub.f32 1.0, %v150
    %v152 = vmul.f32 %v149, %v151
    %v153 = vadd.f32 %v149, %v152
    %vm154 = vweird.f32 %v133
    %vm155 = vweird.f32 %v149
    %vm156 = vmor %vm154, %vm155
    %v157 = vsel %vm156, %v149, %v153
    %v158 = vand.u32 2147483647, %v133
    %vm159 = vcmp.eq.f32.partialorder %v158, 8.507059e+37
    %v160 = vand.u32 %v133, 2147483648
    %v161 = vor.u32 1.1754944e-38, %v160
    %v162 = vsel %vm159, %v161, %v157
    %v163 = vmul.f32 %v119, %v162
    %164 = vxpose.xlu0.b32.start [1/16] %v148, 128
    %165 = vxpose.xlu0.b32.cont [2/16] 0.0, 128
    %166 = vxpose.xlu0.b32.cont [3/16] 0.0, 128
    %167 = vxpose.xlu0.b32.cont [4/16] 0.0, 128
    %168 = vxpose.xlu0.b32.cont [5/16] 0.0, 128
    %169 = vxpose.xlu0.b32.cont [6/16] 0.0, 128
    %170 = vxpose.xlu0.b32.cont [7/16] 0.0, 128
    %171 = vxpose.xlu0.b32.cont [8/16] 0.0, 128
    %172 = vxpose.xlu0.b32.cont [9/16] 0.0, 128
    %173 = vxpose.xlu0.b32.cont [10/16] 0.0, 128
    %174 = vxpose.xlu0.b32.cont [11/16] 0.0, 128
    %175 = vxpose.xlu0.b32.cont [12/16] 0.0, 128
    %176 = vxpose.xlu0.b32.cont [13/16] 0.0, 128
    %177 = vxpose.xlu0.b32.cont [14/16] 0.0, 128
    %178 = vxpose.xlu0.b32.cont [15/16] 0.0, 128
    %179 = vxpose.xlu0.b32.end [16/16] 0.0, 128
    %v180 = vpop.trf.xlu0
    %v181 = vpop.trf.xlu0
    %v182 = vpop.trf.xlu0
    %v183 = vpop.trf.xlu0
    %v184 = vpop.trf.xlu0
    %v185 = vpop.trf.xlu0
    %v186 = vpop.trf.xlu0
    %v187 = vpop.trf.xlu0
    %v188 = vpop.trf.xlu0
    %v189 = vpop.trf.xlu0
    %v190 = vpop.trf.xlu0
    %v191 = vpop.trf.xlu0
    %v192 = vpop.trf.xlu0
    %v193 = vpop.trf.xlu0
    %v194 = vpop.trf.xlu0
    %v195 = vpop.trf.xlu0
    %v197 = vsel %vm99, %v180, 0
    %199 = vmatpush.msra.mxu0 0.0
    %200 = vmatpush.msra.mxu0 0.0
    %201 = vmatpush.msra.mxu0 0.0
    %202 = vmatpush.msra.mxu0 0.0
    %203 = vmatpush.msra.mxu0 0.0
    %204 = vmatpush.msra.mxu0 0.0
    %205 = vmatpush.msra.mxu0 0.0
    %206 = vmatpush.msra.mxu0 0.0
    %207 = vmatpush.msra.mxu0 0.0
    %208 = vmatpush.msra.mxu0 0.0
    %209 = vmatpush.msra.mxu0 0.0
    %210 = vmatpush.msra.mxu0 0.0
    %211 = vmatpush.msra.mxu0 0.0
    %212 = vmatpush.msra.mxu0 0.0
    %213 = vmatpush.msra.mxu0 0.0
    %214 = vmatpush.msra.mxu0 %v21
    %215 = vmatmul.f32.gmra.mxu0 %v197
    %v216 = vpop.f32.mrf.mxu0
    %v217 = vadd.f32 0.0, %v216
    %218 = vdwg.mxu0
    %219 = vxpose.xlu0.b32.start [1/16] %v163, 128
    %220 = vxpose.xlu0.b32.cont [2/16] 0.0, 128
    %221 = vxpose.xlu0.b32.cont [3/16] 0.0, 128
    %222 = vxpose.xlu0.b32.cont [4/16] 0.0, 128
    %223 = vxpose.xlu0.b32.cont [5/16] 0.0, 128
    %224 = vxpose.xlu0.b32.cont [6/16] 0.0, 128
    %225 = vxpose.xlu0.b32.cont [7/16] 0.0, 128
    %226 = vxpose.xlu0.b32.cont [8/16] 0.0, 128
    %227 = vxpose.xlu0.b32.cont [9/16] 0.0, 128
    %228 = vxpose.xlu0.b32.cont [10/16] 0.0, 128
    %229 = vxpose.xlu0.b32.cont [11/16] 0.0, 128
    %230 = vxpose.xlu0.b32.cont [12/16] 0.0, 128
    %231 = vxpose.xlu0.b32.cont [13/16] 0.0, 128
    %232 = vxpose.xlu0.b32.cont [14/16] 0.0, 128
    %233 = vxpose.xlu0.b32.cont [15/16] 0.0, 128
    %234 = vxpose.xlu0.b32.end [16/16] 0.0, 128
    %v235 = vpop.trf.xlu0
    %v236 = vpop.trf.xlu0
    %v237 = vpop.trf.xlu0
    %v238 = vpop.trf.xlu0
    %v239 = vpop.trf.xlu0
    %v240 = vpop.trf.xlu0
    %v241 = vpop.trf.xlu0
    %v242 = vpop.trf.xlu0
    %v243 = vpop.trf.xlu0
    %v244 = vpop.trf.xlu0
    %v245 = vpop.trf.xlu0
    %v246 = vpop.trf.xlu0
    %v247 = vpop.trf.xlu0
    %v248 = vpop.trf.xlu0
    %v249 = vpop.trf.xlu0
    %v250 = vpop.trf.xlu0
    %v252 = vsel %vm99, %v235, 0
    %254 = vmatpush.msra.mxu0 0.0
    %255 = vmatpush.msra.mxu0 0.0
    %256 = vmatpush.msra.mxu0 0.0
    %257 = vmatpush.msra.mxu0 0.0
    %258 = vmatpush.msra.mxu0 0.0
    %259 = vmatpush.msra.mxu0 0.0
    %260 = vmatpush.msra.mxu0 0.0
    %261 = vmatpush.msra.mxu0 0.0
    %262 = vmatpush.msra.mxu0 0.0
    %263 = vmatpush.msra.mxu0 0.0
    %264 = vmatpush.msra.mxu0 0.0
    %265 = vmatpush.msra.mxu0 0.0
    %266 = vmatpush.msra.mxu0 0.0
    %267 = vmatpush.msra.mxu0 0.0
    %268 = vmatpush.msra.mxu0 0.0
    %269 = vmatpush.msra.mxu0 %v22
    %270 = vmatmul.f32.gmra.mxu0 %v252
    %v271 = vpop.f32.mrf.mxu0
    %v272 = vadd.f32 0.0, %v271
    %273 = vdwg.mxu0
    %274 = vst.msk [vmem:[#allocation2] sm:$0xff] %vm31, %v217
    %275 = vst.msk [vmem:[#allocation2 + $0x8] sm:$0xff] %vm31, %v272
    // Predicated region
    $region22: #{tpu_custom_call.1} parent=1 // pred_check
      _
    $region23: #{tpu_custom_call.1} parent=1 // pred_check_branch
      %277 = sbr.rel (0) target = $region25
    $region24: #{tpu_custom_call.1} parent=1 // pred_region
      %279 = vsyncadd [#allocation3], 0
      %s280 = sshll.u32 [#allocation2], 4
      %s281 = int_to_ptr.vmem [resolvable:$true] %s280
      %s282 = sshll.u32 %s5, 4
      %s283 = int_to_ptr.hbm [resolvable:$true] %s282
      %288 = dma.vmem_to_hbm [thread:$0]  %s281, 256, %s283, [#allocation3], 128, 128, 8
    $region25: #{tpu_custom_call.1} parent=1 // pred_fallthru
      _
    // Predicated region
    $region26: #{tpu_custom_call.1} parent=1 // pred_check
      _
    $region27: #{tpu_custom_call.1} parent=1 // pred_check_branch
      %290 = sbr.rel (0) target = $region29
    $region28: #{tpu_custom_call.1} parent=1 // pred_region
      %292 = dma.done [#allocation3], 256
    $region29: #{tpu_custom_call.1} parent=1 // pred_fallthru
      _
    %293 = vsyncpa [#allocation3], 1

</llo_original>
